<compile_context>
chip_gen: v7x
topology: tpu7x:2x2x1
jax: 0.10.0
libtpu: 0.0.40
codegen_flags: <defaults>
</compile_context>

<pallas_src>
import functools

import jax
import jax.numpy as jnp
from jax.experimental import pallas as pl
from jax.experimental.pallas import tpu as pltpu

LANES = 128
MAX_TILE_ROWS = 1024            # 1024 x 128 f32 = 0.5 MiB per buffer (~86% of roofline)
VMEM_LIMIT_BYTES = 32 * 1024 * 1024
SQRT3 = 1.7320508075688772


def _round_up(a, b):
    return (a + b - 1) // b * b


def _sublane_granularity(dtype):
    # f32 -> 8, bf16/f16 -> 16, int8/fp8 -> 32 (native sublane tiling)
    return 8 * (4 // jnp.dtype(dtype).itemsize)


# ---------------------------------------------------------------------------
# Kernel 1: per-block partial min / max -> (8, 128) lane/sublane-dense partials
# ---------------------------------------------------------------------------
def _minmax_partial_kernel(x_ref, min_ref, max_ref):
    x = x_ref[...].astype(jnp.float32)
    xr = x.reshape(x.shape[0] // 8, 8, LANES)      # groups of 8 sublanes
    min_ref[...] = jnp.min(xr, axis=0)             # elementwise across vregs (VPU only)
    max_ref[...] = jnp.max(xr, axis=0)


# ---------------------------------------------------------------------------
# Kernel 2a: training-mode hot path (stateless hash noise + single FMA + sign)
# ---------------------------------------------------------------------------
def _binarize_train_kernel(scale_ref, seed_ref, x_ref, o_ref, *, t, unit, tile_rows):
    i = pl.program_id(0)
    x = x_ref[...].astype(jnp.float32)
    shape = x.shape

    # Unique counter per element (global row * 128 + lane), mixed with the seed.
    row = jax.lax.broadcasted_iota(jnp.int32, shape, 0) + i * tile_rows
    col = jax.lax.broadcasted_iota(jnp.int32, shape, 1)
    idx = row * LANES + col
    v = idx.astype(jnp.uint32) ^ seed_ref[0].astype(jnp.uint32)

    # lowbias32-style integer mix (pure VPU; portable to interpret mode).
    v = v * jnp.uint32(0x9E3779B9)
    v = v ^ (v >> 16)
    v = v * jnp.uint32(0x7FEB352D)
    v = v ^ (v >> 15)
    v = v * jnp.uint32(0x846CA68B)
    v = v ^ (v >> 16)

    # 4 x 8-bit uniforms -> Irwin-Hall(4) approximate standard normal.
    b0 = v & jnp.uint32(0xFF)
    b1 = (v >> 8) & jnp.uint32(0xFF)
    b2 = (v >> 16) & jnp.uint32(0xFF)
    b3 = v >> 24
    s4 = (b0 + b1 + b2 + b3).astype(jnp.int32).astype(jnp.float32)   # mean 510, std 256/sqrt(3)

    # 0.7*x + 0.3*(x + scale*unit*(randn/2))  ==  x + 0.15*unit*scale*randn
    # randn ~= (s4 - 510) * sqrt(3)/256   ->   fold everything into one scalar coef.
    coef = scale_ref[0] * (0.15 * unit * SQRT3 / 256.0)
    # sign(tanh(z*t)) == sign(z*t): tanh removed (EUP-free).
    o_ref[...] = jnp.sign((x + coef * (s4 - 510.0)) * t).astype(o_ref.dtype)


# ---------------------------------------------------------------------------
# Kernel 2b: eval-mode hot path (pure streaming sign)
# ---------------------------------------------------------------------------
def _binarize_eval_kernel(x_ref, o_ref, *, t):
    x = x_ref[...].astype(jnp.float32)
    o_ref[...] = jnp.sign(x * t).astype(o_ref.dtype)


# ---------------------------------------------------------------------------
# Wrapper
# ---------------------------------------------------------------------------
def advanced_noisy_input_binarizer(x, *, t=1, bit=1, training=True, key=None):
    """JAX/Pallas equivalent of AdvancedNoisyInputBinarizer.forward (derivative_funct=tanh)."""
    orig_shape = x.shape
    orig_dtype = x.dtype

    gran = _sublane_granularity(orig_dtype)

    xf = x.reshape(-1)
    n = xf.shape[0]
    rows_needed = pl.cdiv(n, LANES)
    rows_aligned = _round_up(max(rows_needed, 1), gran)

    tile_rows = min(MAX_TILE_ROWS, rows_aligned)
    # v7x megacore: make sure the ("parallel",) grid has at least 2 steps when possible.
    if rows_aligned // tile_rows < 2 and rows_aligned >= 2 * gran:
        tile_rows = _round_up(pl.cdiv(rows_aligned, 2), gran)
    grid_n = pl.cdiv(rows_aligned, tile_rows)
    rows = grid_n * tile_rows                    # multiple of tile_rows (no tail masking)
    n_pad = rows * LANES

    padded = n_pad != n
    if padded:
        # Edge-pad: global min/max over the padded slab is unchanged; extra rows sliced off.
        xf = jnp.pad(xf, (0, n_pad - n), mode="edge")
    xp = xf.reshape(rows, LANES)

    tile_spec = pl.BlockSpec((tile_rows, LANES), lambda i: (i, 0))
    compiler_params = pltpu.CompilerParams(
        dimension_semantics=("parallel",),
        vmem_limit_bytes=VMEM_LIMIT_BYTES,
    )

    if training:
        # --- pass 1: per-block (8, 128) partial min / max, reduced outside (tiny) ---
        mins, maxs = pl.pallas_call(
            _minmax_partial_kernel,
            out_shape=(
                jax.ShapeDtypeStruct((grid_n * 8, LANES), jnp.float32),
                jax.ShapeDtypeStruct((grid_n * 8, LANES), jnp.float32),
            ),
            grid=(grid_n,),
            in_specs=[tile_spec],
            out_specs=(
                pl.BlockSpec((8, LANES), lambda i: (i, 0)),
                pl.BlockSpec((8, LANES), lambda i: (i, 0)),
            ),
            compiler_params=compiler_params,
        )(xp)
        scale_arr = (jnp.max(maxs) - jnp.min(mins)).astype(jnp.float32).reshape(1)

        if key is None:
            key = jax.random.PRNGKey(0)
        # NOTE: pass a fresh key every training step or the regularization noise repeats.
        seed_arr = jax.random.randint(
            key, (1,), 0, jnp.iinfo(jnp.int32).max, dtype=jnp.int32
        )

        unit = 1.0 / (2.0 ** bit - 1.0)
        # scalar-prefetch refs are appended to index_map args -> swallow them.
        tile_spec_pf = pl.BlockSpec((tile_rows, LANES), lambda i, *_: (i, 0))
        kernel = functools.partial(
            _binarize_train_kernel, t=float(t), unit=float(unit), tile_rows=tile_rows
        )
        out = pl.pallas_call(
            kernel,
            out_shape=jax.ShapeDtypeStruct((rows, LANES), orig_dtype),
            grid_spec=pltpu.PrefetchScalarGridSpec(
                num_scalar_prefetch=2,        # scale, seed live in SMEM
                grid=(grid_n,),
                in_specs=[tile_spec_pf],
                out_specs=tile_spec_pf,
            ),
            compiler_params=compiler_params,
        )(scale_arr, seed_arr, xp)
    else:
        out = pl.pallas_call(
            functools.partial(_binarize_eval_kernel, t=float(t)),
            out_shape=jax.ShapeDtypeStruct((rows, LANES), orig_dtype),
            grid=(grid_n,),
            in_specs=[tile_spec],
            out_specs=tile_spec,
            compiler_params=compiler_params,
        )(xp)

    if padded:
        out = out.reshape(-1)[:n]
    return out.reshape(orig_shape)


if __name__ == "__main__":
    # No learnable parameters in this module (derivative_funct=tanh, t=1).
    key = jax.random.PRNGKey(0)
    kx, kn = jax.random.split(key)
    x = jax.random.normal(kx, (2, 4, 16, 16), dtype=jnp.float32)  # NCHW

    # training-mode forward (PyTorch default module state)
    y_train = advanced_noisy_input_binarizer(x, t=1, training=True, key=kn)
    y_train = jax.block_until_ready(y_train)

    # eval-mode forward + reference check
    y_eval = advanced_noisy_input_binarizer(x, t=1, training=False)
    y_eval = jax.block_until_ready(y_eval)
    y_eval_ref = jnp.sign(jnp.tanh(x * 1))

    assert y_train.shape == x.shape and y_train.dtype == x.dtype
    assert y_eval.shape == x.shape and y_eval.dtype == x.dtype
    assert jnp.all(jnp.abs(y_train) <= 1.0)      # outputs in {-1, 0, +1}
    assert jnp.allclose(y_eval, y_eval_ref)

    print("KERNEL_OK")
</pallas_src>

<mosaic_0001>
module attributes {stable_mosaic.version = 11 : i64} {
  func.func @_minmax_partial_kernel(%arg0: i32, %arg1: memref<8x128xf32, #tpu.memory_space<vmem>>, %arg2: memref<8x128xf32, #tpu.memory_space<vmem>>, %arg3: memref<8x128xf32, #tpu.memory_space<vmem>>) attributes {dimension_semantics = [#tpu.dimension_semantics<parallel>], iteration_bounds = array<i64: 2>, scalar_prefetch = 0 : i64, scratch_operands = 0 : i64, tpu.core_type = #tpu.core_type<tc>, window_params = [{transform_indices = @transform_0, window_bounds = array<i64: 8, 128>}, {transform_indices = @transform_1, window_bounds = array<i64: 8, 128>}, {transform_indices = @transform_2, window_bounds = array<i64: 8, 128>}]} {
    %c0 = arith.constant 0 : index
    %c0_0 = arith.constant 0 : index
    %0 = vector.load %arg1[%c0, %c0_0] : memref<8x128xf32, #tpu.memory_space<vmem>>, vector<8x128xf32>
    %1 = vector.shape_cast %0 : vector<8x128xf32> to vector<1x8x128xf32>
    %cst = arith.constant dense<0x7F800000> : vector<8x128xf32>
    %2 = vector.multi_reduction <minimumf>, %1, %cst [0] : vector<1x8x128xf32> to vector<8x128xf32>
    %c0_1 = arith.constant 0 : index
    %c0_2 = arith.constant 0 : index
    %3 = vector.load %arg2[%c0_1, %c0_2] : memref<8x128xf32, #tpu.memory_space<vmem>>, vector<8x128xf32>
    tpu.vector_store %arg2[%c0_1, %c0_2], %2 {strides = array<i32>} : memref<8x128xf32, #tpu.memory_space<vmem>>, vector<8x128xf32>,
    %cst_3 = arith.constant dense<0xFF800000> : vector<8x128xf32>
    %4 = vector.multi_reduction <maximumf>, %1, %cst_3 [0] : vector<1x8x128xf32> to vector<8x128xf32>
    %c0_4 = arith.constant 0 : index
    %c0_5 = arith.constant 0 : index
    %5 = vector.load %arg3[%c0_4, %c0_5] : memref<8x128xf32, #tpu.memory_space<vmem>>, vector<8x128xf32>
    tpu.vector_store %arg3[%c0_4, %c0_5], %4 {strides = array<i32>} : memref<8x128xf32, #tpu.memory_space<vmem>>, vector<8x128xf32>,
    return
  }
  func.func @transform_0(%arg0: i32) -> (i32, i32) {
    %c0_i32 = arith.constant 0 : i32
    %c0_i32_0 = arith.constant 0 : i32
    return %arg0, %c0_i32 : i32, i32
  }
  func.func @transform_1(%arg0: i32) -> (i32, i32) {
    %c0_i32 = arith.constant 0 : i32
    %c0_i32_0 = arith.constant 0 : i32
    return %arg0, %c0_i32 : i32, i32
  }
  func.func @transform_2(%arg0: i32) -> (i32, i32) {
    %c0_i32 = arith.constant 0 : i32
    %c0_i32_0 = arith.constant 0 : i32
    return %arg0, %c0_i32 : i32, i32
  }
}

</mosaic_0001>

<llo_original>
// kernel: tpu_custom_call.1
$region0: #{tpu_custom_call.1}
  #allocation0 [shape = 'u32[]', space=smem, size = 0x4, offset = 0x4, fixed_abs, tag = 'smem constant byte address 0x4 - core index']
  #allocation1 [shape = 'u32[144,128]{1,0:T(1,128)}', space=vmem, size = 0x12000, scoped, tag = 'internal scratch']
  %s0 = inlined_call_operand.hbm [shape: f32[16,128], index: 0, kind: input, shape index: {}]
  %s1 = inlined_call_operand.hbm [shape: f32[16,128], index: 1, kind: output, shape index: {0}]
  %s2 = inlined_call_operand.hbm [shape: f32[16,128], index: 2, kind: output, shape index: {1}]
  %3 = xla_tuple %s1, %s2
  %s4 = sld [smem:[#allocation0]]
  $region49: #{tpu_custom_call.1} parent=0
    _
  %s6 = ssub.s32 1, %s4
  %s7 = scalar_select 0, %s6, %s4
  $region1: #{tpu_custom_call.1} parent=0
    #allocation2 [shape = 'u8[8192]{0}', space=vmem, size = 0x2000, scoped, tag = 'input window, operand 0']
    #allocation3 [shape = 's32[2]{0}', space=sflag, size = 0x8, scoped, tag = 'scoped memory for tpu_custom_call.1']
    #allocation4 [shape = 's32[2]{0}', space=sflag, size = 0x8, scoped, tag = 'scoped memory for tpu_custom_call.1']
    #allocation5 [shape = 'u8[8192]{0}', space=vmem, size = 0x2000, scoped, tag = 'output window, operand 0']
    #allocation6 [shape = 'u8[8192]{0}', space=vmem, size = 0x2000, scoped, tag = 'output window, operand 1']
    #allocation7 [shape = 's32[2]{0}', space=sflag, size = 0x8, scoped, tag = 'scoped memory for tpu_custom_call.1']
    %8 = vsyncpa [#allocation3], 0
    %s9 = scalar_lea.sflag [#allocation3], 1
    %10 = vsyncpa %s9, 0
    %11 = vsyncpa [#allocation4], 0
    %s12 = scalar_lea.sflag [#allocation4], 1
    %13 = vsyncpa %s12, 0
    %14 = vsyncpa [#allocation7], 0
    %s15 = scalar_lea.sflag [#allocation7], 1
    %16 = vsyncpa %s15, 0
    loop: start=0, step=1, limit=4
    $region2: #{tpu_custom_call.1} parent=1 // loop_pre_header
      _
    $region3: #{tpu_custom_call.1} parent=1 // loop_header
      %s18 = sphi 0, %s22
      %p19 = scmp.ge.s32.totalorder %s18, 4
      %s28 = sphi 0, %s30
      %s31 = sphi 0, %s28
      %s32 = sphi 0, %s31
      %s48 = sphi 0, %s32
      %s54 = sphi 0, %s56
      %s57 = sphi 0, %s54
      %s58 = sphi 0, %s57
      %s74 = sphi 0, %s58
      %s80 = sphi 0, %s82
      %s83 = sphi 0, %s80
      %s84 = sphi 0, %s83
      %s100 = sphi 0, %s84
    $region4: #{tpu_custom_call.1} parent=1 // loop_header_branch
      %21 = sbr.rel (%p19) target = $region8
    $region5: #{tpu_custom_call.1} parent=1 // loop_body
      %s23 = ssub.s32 %s18, 1
      %s24 = ssub.s32 %s18, 2
      %s25 = sadd.s32 %s18, 1
      %s26 = ssub.s32 %s18, %s25
      %p27 = scmp.eq.s32.totalorder %s26, 0
      %s29 = sadd.s32 %s28, 1
      %s30 = scalar_select %p27, %s28, %s29
      %p33 = pneg %p27
      %p34 = scmp.eq.s32.totalorder %s18, 1
      %p35 = por %p33, %p34
      %p36 = scmp.ne.s32.totalorder %s28, %s31
      %p37 = scmp.eq.s32.totalorder %s18, 0
      %p38 = por %p36, %p37
      %p39 = scmp.ne.s32.totalorder %s28, %s31
      %p40 = scmp.eq.s32.totalorder %s23, 1
      %p41 = por %p39, %p40
      %p42 = scmp.ne.s32.totalorder %s31, %s32
      %p43 = scmp.eq.s32.totalorder %s23, 0
      %p44 = por %p42, %p43
      %p45 = scmp.ne.s32.totalorder %s31, %s32
      %p46 = scmp.eq.s32.totalorder %s24, 1
      %p47 = por %p45, %p46
      %p49 = scmp.ne.s32.totalorder %s32, %s48
      %p50 = scmp.eq.s32.totalorder %s24, 0
      %p51 = por %p49, %p50
      %s52 = ssub.s32 %s18, %s25
      %p53 = scmp.eq.s32.totalorder %s52, 0
      %s55 = sadd.s32 %s54, 1
      %s56 = scalar_select %p53, %s54, %s55
      %p59 = pneg %p53
      %p60 = scmp.eq.s32.totalorder %s18, 1
      %p61 = por %p59, %p60
      %p62 = scmp.ne.s32.totalorder %s54, %s57
      %p63 = scmp.eq.s32.totalorder %s18, 0
      %p64 = por %p62, %p63
      %p65 = scmp.ne.s32.totalorder %s54, %s57
      %p66 = scmp.eq.s32.totalorder %s23, 1
      %p67 = por %p65, %p66
      %p68 = scmp.ne.s32.totalorder %s57, %s58
      %p69 = scmp.eq.s32.totalorder %s23, 0
      %p70 = por %p68, %p69
      %p71 = scmp.ne.s32.totalorder %s57, %s58
      %p72 = scmp.eq.s32.totalorder %s24, 1
      %p73 = por %p71, %p72
      %p75 = scmp.ne.s32.totalorder %s58, %s74
      %p76 = scmp.eq.s32.totalorder %s24, 0
      %p77 = por %p75, %p76
      %s78 = ssub.s32 %s18, %s25
      %p79 = scmp.eq.s32.totalorder %s78, 0
      %s81 = sadd.s32 %s80, 1
      %s82 = scalar_select %p79, %s80, %s81
      %p85 = pneg %p79
      %p86 = scmp.eq.s32.totalorder %s18, 1
      %p87 = por %p85, %p86
      %p88 = scmp.ne.s32.totalorder %s80, %s83
      %p89 = scmp.eq.s32.totalorder %s18, 0
      %p90 = por %p88, %p89
      %p91 = scmp.ne.s32.totalorder %s80, %s83
      %p92 = scmp.eq.s32.totalorder %s23, 1
      %p93 = por %p91, %p92
      %p94 = scmp.ne.s32.totalorder %s83, %s84
      %p95 = scmp.eq.s32.totalorder %s23, 0
      %p96 = por %p94, %p95
      %p97 = scmp.ne.s32.totalorder %s83, %s84
      %p98 = scmp.eq.s32.totalorder %s24, 1
      %p99 = por %p97, %p98
      %p101 = scmp.ne.s32.totalorder %s84, %s100
      %p102 = scmp.eq.s32.totalorder %s24, 0
      %p103 = por %p101, %p102
      %p104 = scmp.le.s32.totalorder 1, %s18
      %p105 = scmp.lt.s32.totalorder %s18, 3
      %p106 = pnand %p104, %p105
      %p107 = pneg %p106
      // Predicated region
      $region9: #{tpu_custom_call.1} parent=5 // pred_check
        _
      $region10: #{tpu_custom_call.1} parent=5 // pred_check_branch
        %109 = sbr.rel (%p106) target = $region12
      $region11: #{tpu_custom_call.1} parent=5 // pred_region
        %s110 = ssub.s32 %s18, 1
      $region12: #{tpu_custom_call.1} parent=5 // pred_fallthru
        _
      %p111 = scmp.lt.s32.totalorder %s18, 2
      // Predicated region
      $region13: #{tpu_custom_call.1} parent=5 // pred_check
        %p112 = pneg %p111
      $region14: #{tpu_custom_call.1} parent=5 // pred_check_branch
        %114 = sbr.rel (%p112) target = $region16
      $region15: #{tpu_custom_call.1} parent=5 // pred_region
        // Predicated region
        $region17: #{tpu_custom_call.1} parent=15 // pred_check
          %p115 = pneg %p38
        $region18: #{tpu_custom_call.1} parent=15 // pred_check_branch
          %117 = sbr.rel (%p115) target = $region20
        $region19: #{tpu_custom_call.1} parent=15 // pred_region
          %s118 = sand.u32 %s28, 1
          %s119 = scalar_lea.sflag [#allocation3], %s118
          %s120 = sand.u32 %s28, 1
          %s121 = smul.addr %s120, 8
          %s122 = scalar_lea.vmem [#allocation2], %s121
          %s124 = ssub.s32 128, 128
          %125 = vsyncadd %s119, %s124
          %s126 = smul.addr %s18, 128
          %s127 = scalar_lea.hbm %s0, %s126
          %s129 = sshll.u32 %s122, 4
          %s130 = int_to_ptr.vmem [resolvable:$true] %s129
          %132 = dma.hbm_to_vmem [thread:$0]  %s127, 128, %s130, %s119
        $region20: #{tpu_custom_call.1} parent=15 // pred_fallthru
          _
      $region16: #{tpu_custom_call.1} parent=5 // pred_fallthru
        _
      %p133 = scmp.le.s32.totalorder 1, %s18
      %p134 = scmp.lt.s32.totalorder %s18, 3
      %p135 = pnand %p133, %p134
      %p136 = pneg %p135
      // Predicated region
      $region21: #{tpu_custom_call.1} parent=5 // pred_check
        _
      $region22: #{tpu_custom_call.1} parent=5 // pred_check_branch
        %138 = sbr.rel (%p135) target = $region24
      $region23: #{tpu_custom_call.1} parent=5 // pred_region
        %s139 = ssub.s32 %s18, 1
        %s140 = sand.u32 %s31, 1
        %s141 = scalar_lea.sflag [#allocation3], %s140
        %s142 = sand.u32 %s31, 1
        %s143 = smul.addr %s142, 8
        %s144 = scalar_lea.vmem [#allocation2], %s143
        // Predicated region
        $region25: #{tpu_custom_call.1} parent=23 // pred_check
          %p145 = pneg %p44
        $region26: #{tpu_custom_call.1} parent=23 // pred_check_branch
          %147 = sbr.rel (%p145) target = $region28
        $region27: #{tpu_custom_call.1} parent=23 // pred_region
          %148 = dma.done %s141, 128
        $region28: #{tpu_custom_call.1} parent=23 // pred_fallthru
          _
        %s149 = sand.u32 %s31, 1
        %s150 = scalar_lea.sflag [#allocation3], %s149
        %s151 = sand.u32 %s31, 1
        %s152 = smul.addr %s151, 8
        %s153 = scalar_lea.vmem [#allocation2], %s152
        %p154 = pneg %p44
        %p155 = pneg %p41
        %p156 = pneg %p70
        %p157 = pneg %p67
        %s158 = sand.u32 %s57, 1
        %s159 = scalar_lea.sflag [#allocation4], %s158
        %s160 = sand.u32 %s57, 1
        %s161 = smul.addr %s160, 8
        %s162 = scalar_lea.vmem [#allocation5], %s161
        %p163 = pneg %p96
        %p164 = pneg %p93
        %s165 = sand.u32 %s83, 1
        %s166 = scalar_lea.sflag [#allocation7], %s165
        %s167 = sand.u32 %s83, 1
        %s168 = smul.addr %s167, 8
        %s169 = scalar_lea.vmem [#allocation6], %s168
        %v170 = vld [vmem:[%s144] sm:$0xff]
        %171 = vst [vmem:[%s162] sm:$0xff] %v170
        %172 = vst [vmem:[%s169] sm:$0xff] %v170
        %s173 = sand.u32 %s57, 1
        %s174 = scalar_lea.sflag [#allocation4], %s173
        %s175 = sand.u32 %s57, 1
        %s176 = smul.addr %s175, 8
        %s177 = scalar_lea.vmem [#allocation5], %s176
        %s178 = sand.u32 %s83, 1
        %s179 = scalar_lea.sflag [#allocation7], %s178
        %s180 = sand.u32 %s83, 1
        %s181 = smul.addr %s180, 8
        %s182 = scalar_lea.vmem [#allocation6], %s181
        // Predicated region
        $region29: #{tpu_custom_call.1} parent=23 // pred_check
          %p183 = pneg %p67
        $region30: #{tpu_custom_call.1} parent=23 // pred_check_branch
          %185 = sbr.rel (%p183) target = $region32
        $region31: #{tpu_custom_call.1} parent=23 // pred_region
          %s187 = ssub.s32 128, 128
          %188 = vsyncadd %s174, %s187
          %s189 = smul.addr %s23, 128
          %s190 = scalar_lea.hbm %s1, %s189
          %s192 = sshll.u32 %s177, 4
          %s193 = int_to_ptr.vmem [resolvable:$true] %s192
          %195 = dma.vmem_to_hbm [thread:$0]  %s193, 128, %s190, %s174
        $region32: #{tpu_custom_call.1} parent=23 // pred_fallthru
          _
        // Predicated region
        $region33: #{tpu_custom_call.1} parent=23 // pred_check
          %p196 = pneg %p93
        $region34: #{tpu_custom_call.1} parent=23 // pred_check_branch
          %198 = sbr.rel (%p196) target = $region36
        $region35: #{tpu_custom_call.1} parent=23 // pred_region
          %s200 = ssub.s32 128, 128
          %201 = vsyncadd %s179, %s200
          %s202 = smul.addr %s23, 128
          %s203 = scalar_lea.hbm %s2, %s202
          %s205 = sshll.u32 %s182, 4
          %s206 = int_to_ptr.vmem [resolvable:$true] %s205
          %208 = dma.vmem_to_hbm [thread:$0]  %s206, 128, %s203, %s179
        $region36: #{tpu_custom_call.1} parent=23 // pred_fallthru
          _
      $region24: #{tpu_custom_call.1} parent=5 // pred_fallthru
        _
      %p209 = scmp.le.s32.totalorder 2, %s18
      // Predicated region
      $region37: #{tpu_custom_call.1} parent=5 // pred_check
        %p210 = pneg %p209
      $region38: #{tpu_custom_call.1} parent=5 // pred_check_branch
        %212 = sbr.rel (%p210) target = $region40
      $region39: #{tpu_custom_call.1} parent=5 // pred_region
        %s213 = ssub.s32 %s18, 2
        // Predicated region
        $region41: #{tpu_custom_call.1} parent=39 // pred_check
          %p214 = pneg %p73
        $region42: #{tpu_custom_call.1} parent=39 // pred_check_branch
          %216 = sbr.rel (%p214) target = $region44
        $region43: #{tpu_custom_call.1} parent=39 // pred_region
          %s217 = sand.u32 %s58, 1
          %s218 = scalar_lea.sflag [#allocation4], %s217
          %s219 = sand.u32 %s58, 1
          %s220 = smul.addr %s219, 8
          %s221 = scalar_lea.vmem [#allocation5], %s220
          %222 = dma.done %s218, 128
        $region44: #{tpu_custom_call.1} parent=39 // pred_fallthru
          _
        // Predicated region
        $region45: #{tpu_custom_call.1} parent=39 // pred_check
          %p223 = pneg %p99
        $region46: #{tpu_custom_call.1} parent=39 // pred_check_branch
          %225 = sbr.rel (%p223) target = $region48
        $region47: #{tpu_custom_call.1} parent=39 // pred_region
          %s226 = sand.u32 %s84, 1
          %s227 = scalar_lea.sflag [#allocation7], %s226
          %s228 = sand.u32 %s84, 1
          %s229 = smul.addr %s228, 8
          %s230 = scalar_lea.vmem [#allocation6], %s229
          %231 = dma.done %s227, 128
        $region48: #{tpu_custom_call.1} parent=39 // pred_fallthru
          _
      $region40: #{tpu_custom_call.1} parent=5 // pred_fallthru
        _
    $region6: #{tpu_custom_call.1} parent=1 // loop_footer
      %s22 = sadd.s32 1, %s18
    $region7: #{tpu_custom_call.1} parent=1 // loop_footer_branch
      %17 = sbr.rel target = $region3
    $region8: #{tpu_custom_call.1} parent=1 // loop_exit
      _
    %232 = vsyncpa [#allocation3], 1
    %s233 = scalar_lea.sflag [#allocation3], 1
    %234 = vsyncpa %s233, 1
    %235 = vsyncpa [#allocation4], 1
    %s236 = scalar_lea.sflag [#allocation4], 1
    %237 = vsyncpa %s236, 1
    %238 = vsyncpa [#allocation7], 1
    %s239 = scalar_lea.sflag [#allocation7], 1
    %240 = vsyncpa %s239, 1

</llo_original>
